<compile_context>
chip_gen: v6e
topology: v6e:2x2x1
jax: 0.10.0
libtpu: 0.0.40
codegen_flags: <defaults>
</compile_context>

<pallas_src>
import numpy as np
import jax
import jax.numpy as jnp
from jax.experimental import pallas as pl
from jax.experimental.pallas import tpu as pltpu


def _diffusion_loss_kernel(
    sac_ref,    # SMEM (B,)       f32   sqrt_alphas_cumprod[t]
    somac_ref,  # SMEM (B,)       f32   sqrt_one_minus_alphas_cumprod[t]
    x_ref,      # VMEM (C, TILE)        clean image tile (channel-major)
    nz_ref,     # VMEM (C, TILE)        gaussian noise tile
    y_ref,      # VMEM (C, TILE)        conditioning tile
    bias_ref,   # VMEM (Hd, 1)    f32   temb[t[b]] (per batch item)
    w1f_ref,    # VMEM (Hd, 2C)   bf16  fused [W1x^T | W1y^T]
    w2T_ref,    # VMEM (C, Hd)    bf16  W2^T
    out_ref,    # VMEM (8, 128)   f32   per-batch-item sum of squared errors
    acc_ref,    # VMEM (1, TILE)  f32   scratch: per-lane partial accumulator
):
    b = pl.program_id(0)
    j = pl.program_id(1)
    nt = pl.num_programs(1)

    @pl.when(j == 0)
    def _():
        acc_ref[...] = jnp.zeros_like(acc_ref)

    sac = sac_ref[b]        # scalar f32
    somac = somac_ref[b]    # scalar f32

    xT = x_ref[...].astype(jnp.float32)     # (C, TILE)
    nzT = nz_ref[...].astype(jnp.float32)   # (C, TILE)
    yT = y_ref[...].astype(jnp.float32)     # (C, TILE)

    # perturb_x: sqrt_ac[t] * x + sqrt_1m_ac[t] * noise   (f32 elementwise)
    pertT = sac * xT + somac * nzT

    # single fused first-layer dot:  [W1x^T | W1y^T] @ [pert^T ; y^T]  + temb[t]
    stacked = jnp.concatenate([pertT, yT], axis=0).astype(jnp.bfloat16)  # (2C, TILE)
    h = jnp.dot(w1f_ref[...], stacked,
                preferred_element_type=jnp.float32)                      # (Hd, TILE)
    h = jnp.maximum(h + bias_ref[...], 0.0)   # (Hd,1) bias broadcasts over lanes

    # second layer (transposed):  W2^T @ relu(h)
    estT = jnp.dot(w2T_ref[...], h.astype(jnp.bfloat16),
                   preferred_element_type=jnp.float32)                   # (C, TILE)

    # MSE partial: per-lane sum over channels, accumulated across HW tiles
    d = estT - nzT
    acc_ref[...] += jnp.sum(d * d, axis=0, keepdims=True)

    @pl.when(j == nt - 1)
    def _():
        out_ref[...] = jnp.broadcast_to(jnp.sum(acc_ref[...]),
                                        out_ref.shape).astype(out_ref.dtype)


def _pick_hw_tile(hw, c, hd, batch, budget_bytes=24 * 1024 * 1024):
    """Largest HW tile (multiple of 128 dividing HW) whose per-step VMEM
    footprint -- double-buffered inputs, bf16 stacked operand, (Hd, TILE) f32
    hidden + bf16 copy, est/diff temporaries, lane accumulator -- fits a
    conservative budget (safe for v7x's 64 MiB VMEM).  If B == 1, cap the tile
    so the HW axis has >= 2 blocks (keeps both v7x TensorCores busy)."""
    if hw % 128 != 0:
        return hw
    per_lane = (2 * 3 * c * 4     # x / noise / y f32, double buffered
                + 2 * c * 2       # stacked bf16 operand
                + 6 * hd          # hidden f32 + bf16 copy
                + 3 * c * 4       # est / diff / squared-error f32 temporaries
                + 16)             # accumulator + slack
    max_tile = max(128, (budget_bytes // per_lane) // 128 * 128)
    if batch == 1 and hw >= 256:
        max_tile = min(max_tile, (hw // 2) // 128 * 128)
    tile = min(hw, max_tile)
    tile = max(128, (tile // 128) * 128)
    while tile > 128 and hw % tile != 0:
        tile -= 128
    return tile if hw % tile == 0 else hw


def gaussian_diffusion_loss(x_nchw, y_nchw, t, noise_nchw,
                            sqrt_alphas_cumprod, sqrt_one_minus_alphas_cumprod,
                            w1x, w1y, temb, w2):
    """Wrapper: NCHW -> (B, C, HW) (pure reshape), one fused Pallas kernel over
    a (batch="parallel", HW-tile="arbitrary") grid; the loss is accumulated in
    VMEM scratch and one partial per batch item is reduced in the wrapper."""
    B, C, H, W = x_nchw.shape
    HW = H * W
    Hd = w1x.shape[1]

    # ---- lane-dense layout: NCHW -> (B, C, HW); no transpose, no dtype pass
    x = x_nchw.reshape(B, C, HW)
    nz = noise_nchw.reshape(B, C, HW)
    y = y_nchw.reshape(B, C, HW)

    # ---- per-item schedule scalars / time-embedding bias gathered in wrapper
    t = t.astype(jnp.int32)
    sac_t = sqrt_alphas_cumprod.astype(jnp.float32)[t]                 # (B,)
    somac_t = sqrt_one_minus_alphas_cumprod.astype(jnp.float32)[t]     # (B,)
    temb_t = temb.astype(jnp.float32)[t][:, :, None]                   # (B, Hd, 1)

    # ---- fused / transposed weights in bf16 for the MXU (tiny; one-time cost)
    w1f = jnp.concatenate([w1x.T, w1y.T], axis=1).astype(jnp.bfloat16)  # (Hd, 2C)
    w2T = w2.T.astype(jnp.bfloat16)                                     # (C, Hd)

    # ---- HW tiling (VMEM-budgeted; at these shapes a single tile)
    tile_hw = _pick_hw_tile(HW, C, Hd, B)
    assert HW % tile_hw == 0, "HW tile must divide HW exactly"
    nt = HW // tile_hw

    flops = int(2 * B * HW * Hd * (3 * C))
    bytes_accessed = int(x.size * x.dtype.itemsize
                         + nz.size * nz.dtype.itemsize
                         + y.size * y.dtype.itemsize
                         + 2 * (w1f.size + w2T.size) + 4 * temb_t.size
                         + 4 * B * 8 * 128)

    partials = pl.pallas_call(
        _diffusion_loss_kernel,
        out_shape=jax.ShapeDtypeStruct((B, 8, 128), jnp.float32),
        grid=(B, nt),
        in_specs=[
            pl.BlockSpec(memory_space=pltpu.SMEM),                        # sac_t
            pl.BlockSpec(memory_space=pltpu.SMEM),                        # somac_t
            pl.BlockSpec((None, C, tile_hw), lambda b, j: (b, 0, j)),     # x
            pl.BlockSpec((None, C, tile_hw), lambda b, j: (b, 0, j)),     # noise
            pl.BlockSpec((None, C, tile_hw), lambda b, j: (b, 0, j)),     # y
            pl.BlockSpec((None, Hd, 1), lambda b, j: (b, 0, 0)),          # temb[t]
            pl.BlockSpec((Hd, 2 * C), lambda b, j: (0, 0)),               # [W1x^T|W1y^T]
            pl.BlockSpec((C, Hd), lambda b, j: (0, 0)),                   # W2^T
        ],
        out_specs=pl.BlockSpec((None, 8, 128), lambda b, j: (b, 0, 0)),
        scratch_shapes=[pltpu.VMEM((1, tile_hw), jnp.float32)],
        compiler_params=pltpu.CompilerParams(
            dimension_semantics=("parallel", "arbitrary"),
            vmem_limit_bytes=48 * 1024 * 1024),
        cost_estimate=pl.CostEstimate(
            flops=flops, transcendentals=0, bytes_accessed=bytes_accessed),
    )(sac_t, somac_t, x, nz, y, temb_t, w1f, w2T)

    inv_denom = jnp.float32(1.0 / (B * C * HW))
    return jnp.sum(partials[:, 0, 0]) * inv_denom


def reference_loss(x_nchw, y_nchw, t, noise_nchw, sac, somac, w1x, w1y, temb, w2):
    """Pure-JAX (f32) reference of the same forward semantics."""
    B, C, H, W = x_nchw.shape
    xf = x_nchw.reshape(B, C, -1).astype(jnp.float32)
    nf = noise_nchw.reshape(B, C, -1).astype(jnp.float32)
    yf = y_nchw.reshape(B, C, -1).astype(jnp.float32)
    pert = sac[t][:, None, None] * xf + somac[t][:, None, None] * nf
    h = jnp.maximum(
        jnp.einsum("bcp,ch->bhp", pert, w1x)
        + jnp.einsum("bcp,ch->bhp", yf, w1y)
        + temb[t][:, :, None], 0.0)
    est = jnp.einsum("bhp,hc->bcp", h, w2)
    return jnp.mean((est - nf) ** 2)


if __name__ == "__main__":
    # --- small shapes consistent with the module ---
    B, C, H, W = 2, 4, 16, 16          # x: (N, img_channels, *img_size)
    HIDDEN = 32
    T = 8                              # num_timesteps = len(betas)

    # diffusion schedule buffers (as in __init__)
    betas = np.linspace(1e-4, 0.02, T).astype(np.float64)
    alphas = 1.0 - betas
    alphas_cumprod = np.cumprod(alphas)
    sqrt_alphas_cumprod = jnp.asarray(np.sqrt(alphas_cumprod), dtype=jnp.float32)
    sqrt_one_minus_alphas_cumprod = jnp.asarray(
        np.sqrt(1.0 - alphas_cumprod), dtype=jnp.float32)

    # deterministic inputs / parameters
    key = jax.random.PRNGKey(0)
    kx, ky, kt, kn, k1, k2, k3, k4 = jax.random.split(key, 8)
    x = jax.random.normal(kx, (B, C, H, W), dtype=jnp.float32)
    y = jax.random.normal(ky, (B, C, H, W), dtype=jnp.float32)
    # forward(): t = randint(0, num_timesteps, (b,)); noise = randn_like(x)
    t = jax.random.randint(kt, (B,), 0, T, dtype=jnp.int32)
    noise = jax.random.normal(kn, (B, C, H, W), dtype=jnp.float32)

    w1x = 0.1 * jax.random.normal(k1, (C, HIDDEN), dtype=jnp.float32)
    w1y = 0.1 * jax.random.normal(k2, (C, HIDDEN), dtype=jnp.float32)
    temb = 0.1 * jax.random.normal(k3, (T, HIDDEN), dtype=jnp.float32)
    w2 = 0.1 * jax.random.normal(k4, (HIDDEN, C), dtype=jnp.float32)

    loss = gaussian_diffusion_loss(
        x, y, t, noise,
        sqrt_alphas_cumprod, sqrt_one_minus_alphas_cumprod,
        w1x, w1y, temb, w2)
    loss = jax.block_until_ready(loss)

    ref = jax.block_until_ready(reference_loss(
        x, y, t, noise,
        sqrt_alphas_cumprod, sqrt_one_minus_alphas_cumprod,
        w1x, w1y, temb, w2))

    assert np.isfinite(float(loss))
    np.testing.assert_allclose(float(loss), float(ref), rtol=5e-2, atol=1e-4)
    print("KERNEL_OK")
</pallas_src>

<mosaic_0001>
module attributes {stable_mosaic.version = 11 : i64} {
  func.func @_diffusion_loss_kernel(%arg0: i32, %arg1: i32, %arg2: memref<2xf32, #tpu.memory_space<smem>>, %arg3: memref<2xf32, #tpu.memory_space<smem>>, %arg4: memref<1x4x256xf32, #tpu.memory_space<vmem>>, %arg5: memref<1x4x256xf32, #tpu.memory_space<vmem>>, %arg6: memref<1x4x256xf32, #tpu.memory_space<vmem>>, %arg7: memref<1x32x1xf32, #tpu.memory_space<vmem>>, %arg8: memref<32x8xbf16, #tpu.memory_space<vmem>>, %arg9: memref<4x32xbf16, #tpu.memory_space<vmem>>, %arg10: memref<1x8x128xf32, #tpu.memory_space<vmem>>, %arg11: memref<1x256xf32, #tpu.memory_space<vmem>>) attributes {dimension_semantics = [#tpu.dimension_semantics<parallel>, #tpu.dimension_semantics<arbitrary>], iteration_bounds = array<i64: 2, 1>, scalar_prefetch = 0 : i64, scratch_operands = 1 : i64, tpu.core_type = #tpu.core_type<tc>, window_params = [{transform_indices = @transform_0, window_bounds = array<i64: 2>}, {transform_indices = @transform_1, window_bounds = array<i64: 2>}, {transform_indices = @transform_2, window_bounds = array<i64: 1, 4, 256>}, {transform_indices = @transform_3, window_bounds = array<i64: 1, 4, 256>}, {transform_indices = @transform_4, window_bounds = array<i64: 1, 4, 256>}, {transform_indices = @transform_5, window_bounds = array<i64: 1, 32, 1>}, {pipeline_mode = #tpu.pipeline_mode<synchronous>, transform_indices = @transform_6, window_bounds = array<i64: 32, 8>}, {pipeline_mode = #tpu.pipeline_mode<synchronous>, transform_indices = @transform_7, window_bounds = array<i64: 4, 32>}, {transform_indices = @transform_8, window_bounds = array<i64: 1, 8, 128>}]} {
    %c0_i32 = arith.constant 0 : i32
    %0 = arith.cmpi eq, %arg1, %c0_i32 : i32
    %1 = arith.extui %0 : i1 to i32
    %c0_i32_0 = arith.constant 0 : i32
    %2 = arith.cmpi ne, %1, %c0_i32_0 : i32
    scf.if %2 {
      %cst_25 = arith.constant 0.000000e+00 : f32
      %41 = vector.broadcast %cst_25 : f32 to vector<1x256xf32>
      %c0_26 = arith.constant 0 : index
      %c0_27 = arith.constant 0 : index
      %42 = vector.load %arg11[%c0_26, %c0_27] : memref<1x256xf32, #tpu.memory_space<vmem>>, vector<1x256xf32>
      tpu.vector_store %arg11[%c0_26, %c0_27], %41 {strides = array<i32>} : memref<1x256xf32, #tpu.memory_space<vmem>>, vector<1x256xf32>,
    } else {
    }
    %3 = arith.index_cast %arg0 : i32 to index
    %4 = memref.load %arg2[%3] : memref<2xf32, #tpu.memory_space<smem>>
    %5 = arith.index_cast %arg0 : i32 to index
    %6 = memref.load %arg3[%5] : memref<2xf32, #tpu.memory_space<smem>>
    %c0 = arith.constant 0 : index
    %c0_1 = arith.constant 0 : index
    %c0_2 = arith.constant 0 : index
    %7 = vector.load %arg4[%c0, %c0_1, %c0_2] : memref<1x4x256xf32, #tpu.memory_space<vmem>>, vector<1x4x256xf32>
    %8 = vector.shape_cast %7 : vector<1x4x256xf32> to vector<4x256xf32>
    %c0_3 = arith.constant 0 : index
    %c0_4 = arith.constant 0 : index
    %c0_5 = arith.constant 0 : index
    %9 = vector.load %arg5[%c0_3, %c0_4, %c0_5] : memref<1x4x256xf32, #tpu.memory_space<vmem>>, vector<1x4x256xf32>
    %10 = vector.shape_cast %9 : vector<1x4x256xf32> to vector<4x256xf32>
    %c0_6 = arith.constant 0 : index
    %c0_7 = arith.constant 0 : index
    %c0_8 = arith.constant 0 : index
    %11 = vector.load %arg6[%c0_6, %c0_7, %c0_8] : memref<1x4x256xf32, #tpu.memory_space<vmem>>, vector<1x4x256xf32>
    %12 = vector.shape_cast %11 : vector<1x4x256xf32> to vector<4x256xf32>
    %13 = vector.broadcast %4 : f32 to vector<4x256xf32>
    %14 = arith.mulf %13, %8 : vector<4x256xf32>
    %15 = vector.broadcast %6 : f32 to vector<4x256xf32>
    %16 = arith.mulf %15, %10 : vector<4x256xf32>
    %17 = arith.addf %14, %16 : vector<4x256xf32>
    %18 = tpu.concatenate %17, %12 in 0 : vector<4x256xf32>, vector<4x256xf32> -> vector<8x256xf32>
    %19 = arith.truncf %18 : vector<8x256xf32> to vector<8x256xbf16>
    %c0_9 = arith.constant 0 : index
    %c0_10 = arith.constant 0 : index
    %20 = vector.load %arg8[%c0_9, %c0_10] : memref<32x8xbf16, #tpu.memory_space<vmem>>, vector<32x8xbf16>
    %cst = arith.constant dense<0.000000e+00> : vector<32x256xf32>
    %21 = tpu.matmul %20, %19, %cst {dimension_numbers = #tpu.dot_dimension_numbers<[1], [0], [0], [1], [0, 0, 1, 1], [], []>} : vector<32x8xbf16>, vector<8x256xbf16>, vector<32x256xf32> -> vector<32x256xf32>
    %c0_11 = arith.constant 0 : index
    %c0_12 = arith.constant 0 : index
    %c0_13 = arith.constant 0 : index
    %22 = vector.load %arg7[%c0_11, %c0_12, %c0_13] : memref<1x32x1xf32, #tpu.memory_space<vmem>>, vector<1x32x1xf32>
    %23 = vector.shape_cast %22 : vector<1x32x1xf32> to vector<32x1xf32>
    %24 = vector.broadcast %23 : vector<32x1xf32> to vector<32x256xf32>
    %25 = arith.addf %21, %24 : vector<32x256xf32>
    %cst_14 = arith.constant 0.000000e+00 : f32
    %26 = vector.broadcast %cst_14 : f32 to vector<32x256xf32>
    %27 = arith.maximumf %25, %26 : vector<32x256xf32>
    %c0_15 = arith.constant 0 : index
    %c0_16 = arith.constant 0 : index
    %28 = vector.load %arg9[%c0_15, %c0_16] : memref<4x32xbf16, #tpu.memory_space<vmem>>, vector<4x32xbf16>
    %29 = arith.truncf %27 : vector<32x256xf32> to vector<32x256xbf16>
    %cst_17 = arith.constant dense<0.000000e+00> : vector<4x256xf32>
    %30 = tpu.matmul %28, %29, %cst_17 {dimension_numbers = #tpu.dot_dimension_numbers<[1], [0], [0], [1], [0, 0, 1, 1], [], []>} : vector<4x32xbf16>, vector<32x256xbf16>, vector<4x256xf32> -> vector<4x256xf32>
    %31 = arith.subf %30, %10 : vector<4x256xf32>
    %c0_18 = arith.constant 0 : index
    %c0_19 = arith.constant 0 : index
    %32 = vector.load %arg11[%c0_18, %c0_19] : memref<1x256xf32, #tpu.memory_space<vmem>>, vector<1x256xf32>
    %33 = arith.mulf %31, %31 : vector<4x256xf32>
    %cst_20 = arith.constant dense<0.000000e+00> : vector<256xf32>
    %34 = vector.multi_reduction <add>, %33, %cst_20 [0] : vector<4x256xf32> to vector<256xf32>
    %35 = vector.shape_cast %34 : vector<256xf32> to vector<1x256xf32>
    %36 = arith.addf %32, %35 : vector<1x256xf32>
    %c0_21 = arith.constant 0 : index
    %c0_22 = arith.constant 0 : index
    %37 = vector.load %arg11[%c0_21, %c0_22] : memref<1x256xf32, #tpu.memory_space<vmem>>, vector<1x256xf32>
    tpu.vector_store %arg11[%c0_21, %c0_22], %36 {strides = array<i32>} : memref<1x256xf32, #tpu.memory_space<vmem>>, vector<1x256xf32>,
    %c0_i32_23 = arith.constant 0 : i32
    %38 = arith.cmpi eq, %arg1, %c0_i32_23 : i32
    %39 = arith.extui %38 : i1 to i32
    %c0_i32_24 = arith.constant 0 : i32
    %40 = arith.cmpi ne, %39, %c0_i32_24 : i32
    scf.if %40 {
      %c0_25 = arith.constant 0 : index
      %c0_26 = arith.constant 0 : index
      %41 = vector.load %arg11[%c0_25, %c0_26] : memref<1x256xf32, #tpu.memory_space<vmem>>, vector<1x256xf32>
      %42 = vector.shape_cast %41 : vector<1x256xf32> to vector<1x1x256xf32>
      %cst_27 = arith.constant dense<0.000000e+00> : vector<1xf32>
      %43 = vector.multi_reduction <add>, %42, %cst_27 [1, 2] : vector<1x1x256xf32> to vector<1xf32>
      %44 = vector.shape_cast %43 : vector<1xf32> to vector<1x1x1xf32>
      %45 = vector.extract %44[0, 0, 0] : f32 from vector<1x1x1xf32>
      %46 = vector.broadcast %45 : f32 to vector<8x128xf32>
      %c0_28 = arith.constant 0 : index
      %c0_29 = arith.constant 0 : index
      %c0_30 = arith.constant 0 : index
      %47 = vector.load %arg10[%c0_28, %c0_29, %c0_30] : memref<1x8x128xf32, #tpu.memory_space<vmem>>, vector<1x8x128xf32>
      %48 = vector.shape_cast %47 : vector<1x8x128xf32> to vector<8x128xf32>
      %49 = vector.shape_cast %46 : vector<8x128xf32> to vector<1x8x128xf32>
      tpu.vector_store %arg10[%c0_28, %c0_29, %c0_30], %49 {strides = array<i32>} : memref<1x8x128xf32, #tpu.memory_space<vmem>>, vector<1x8x128xf32>,
    } else {
    }
    return
  }
  func.func @transform_0(%arg0: i32, %arg1: i32) -> i32 {
    %c0_i32 = arith.constant 0 : i32
    %c0_i32_0 = arith.constant 0 : i32
    return %c0_i32 : i32
  }
  func.func @transform_1(%arg0: i32, %arg1: i32) -> i32 {
    %c0_i32 = arith.constant 0 : i32
    %c0_i32_0 = arith.constant 0 : i32
    return %c0_i32 : i32
  }
  func.func @transform_2(%arg0: i32, %arg1: i32) -> (i32, i32, i32) {
    %c0_i32 = arith.constant 0 : i32
    %c0_i32_0 = arith.constant 0 : i32
    return %arg0, %c0_i32, %arg1 : i32, i32, i32
  }
  func.func @transform_3(%arg0: i32, %arg1: i32) -> (i32, i32, i32) {
    %c0_i32 = arith.constant 0 : i32
    %c0_i32_0 = arith.constant 0 : i32
    return %arg0, %c0_i32, %arg1 : i32, i32, i32
  }
  func.func @transform_4(%arg0: i32, %arg1: i32) -> (i32, i32, i32) {
    %c0_i32 = arith.constant 0 : i32
    %c0_i32_0 = arith.constant 0 : i32
    return %arg0, %c0_i32, %arg1 : i32, i32, i32
  }
  func.func @transform_5(%arg0: i32, %arg1: i32) -> (i32, i32, i32) {
    %c0_i32 = arith.constant 0 : i32
    %c0_i32_0 = arith.constant 0 : i32
    %c0_i32_1 = arith.constant 0 : i32
    return %arg0, %c0_i32, %c0_i32_0 : i32, i32, i32
  }
  func.func @transform_6(%arg0: i32, %arg1: i32) -> (i32, i32) {
    %c0_i32 = arith.constant 0 : i32
    %c0_i32_0 = arith.constant 0 : i32
    %c0_i32_1 = arith.constant 0 : i32
    return %c0_i32, %c0_i32_0 : i32, i32
  }
  func.func @transform_7(%arg0: i32, %arg1: i32) -> (i32, i32) {
    %c0_i32 = arith.constant 0 : i32
    %c0_i32_0 = arith.constant 0 : i32
    %c0_i32_1 = arith.constant 0 : i32
    return %c0_i32, %c0_i32_0 : i32, i32
  }
  func.func @transform_8(%arg0: i32, %arg1: i32) -> (i32, i32, i32) {
    %c0_i32 = arith.constant 0 : i32
    %c0_i32_0 = arith.constant 0 : i32
    %c0_i32_1 = arith.constant 0 : i32
    return %arg0, %c0_i32, %c0_i32_0 : i32, i32, i32
  }
}

</mosaic_0001>

<llo_original>
// kernel: tpu_custom_call.1
$region0: #{tpu_custom_call.1}
  #allocation0 [shape = 'u32[]', space=smem, size = 0x4, offset = 0x4, fixed_abs, tag = 'smem constant byte address 0x4 - core index']
  #allocation1 [shape = 'u32[144,128]{1,0:T(1,128)}', space=vmem, size = 0x12000, scoped, tag = 'internal scratch']
  #allocation2 [shape = 'f32[1,256]{1,0:T(1,128)}', space=vmem, size = 0x400, scoped, tag = 'scratch operand']
  %s0 = inlined_call_operand.vmem [shape: f32[2], index: 0, kind: input, shape index: {}]
  %s1 = inlined_call_operand.vmem [shape: f32[2], index: 1, kind: input, shape index: {}]
  %s2 = inlined_call_operand.vmem [shape: f32[2,4,256], index: 2, kind: input, shape index: {}]
  %s3 = inlined_call_operand.vmem [shape: f32[2,4,256], index: 3, kind: input, shape index: {}]
  %s4 = inlined_call_operand.vmem [shape: f32[2,4,256], index: 4, kind: input, shape index: {}]
  %s5 = inlined_call_operand.vmem [shape: f32[2,32,1], index: 5, kind: input, shape index: {}]
  %s6 = inlined_call_operand.vmem [shape: bf16[32,8], index: 6, kind: input, shape index: {}]
  %s7 = inlined_call_operand.vmem [shape: bf16[4,32], index: 7, kind: input, shape index: {}]
  %s8 = inlined_call_operand.hbm [shape: f32[2,8,128], index: 8, kind: output, shape index: {}]
  %s9 = sld [smem:[#allocation0]]
  $region81: #{tpu_custom_call.1} parent=0
    _
  %s11 = ssub.s32 1, %s9
  %s12 = scalar_select 0, %s11, %s9
  $region1: #{tpu_custom_call.1} parent=0
    #allocation3 [shape = 'u8[512]{0}', space=smem, size = 0x200, scoped, tag = 'input window, operand 0, single buffered']
    #allocation4 [shape = 's32[2]{0}', space=sflag, size = 0x8, scoped, tag = 'scoped memory for tpu_custom_call.1']
    #allocation5 [shape = 's32[2]{0}', space=sflag, size = 0x8, scoped, tag = 'scoped memory for tpu_custom_call.1']
    #allocation6 [shape = 'u8[512]{0}', space=smem, size = 0x200, scoped, tag = 'input window, operand 1, single buffered']
    #allocation7 [shape = 's32[1]{0}', space=sflag, size = 0x4, scoped, tag = 'scoped memory for tpu_custom_call.1']
    #allocation8 [shape = 'u8[8192]{0}', space=vmem, size = 0x2000, scoped, tag = 'output window, operand 0']
    %13 = vsyncpa [#allocation5], 0
    %14 = vsyncpa [#allocation7], 0
    %15 = vsyncpa [#allocation4], 0
    %s16 = scalar_lea.sflag [#allocation4], 1
    %17 = vsyncpa %s16, 0
    loop: start=0, step=1, limit=4
    $region2: #{tpu_custom_call.1} parent=1 // loop_pre_header
      _
    $region3: #{tpu_custom_call.1} parent=1 // loop_header
      %s19 = sphi 0, %s23
      %p20 = scmp.ge.s32.totalorder %s19, 4
      %s26 = sphi 0, %s38
      %s27 = sphi 0, %s34
      %s28 = sphi 0, %s26
      %s29 = sphi 0, %s27
      %s30 = sphi 0, %s28
      %s31 = sphi 0, %s29
      %s39 = sphi 0, %s39
      %s41 = sphi 0, %s39
      %s42 = sphi 0, %s41
      %s56 = sphi 0, %s42
      %s60 = sphi 0, %s60
      %s62 = sphi 0, %s60
      %s63 = sphi 0, %s62
      %s77 = sphi 0, %s63
      %s85 = sphi 0, %s87
      %s88 = sphi 0, %s85
      %s89 = sphi 0, %s88
      %s105 = sphi 0, %s89
      %s113 = sphi 0, %s115
      %s116 = sphi 0, %s113
      %s117 = sphi 0, %s116
      %s133 = sphi 0, %s117
      %s141 = sphi 0, %s143
      %s144 = sphi 0, %s141
      %s145 = sphi 0, %s144
      %s161 = sphi 0, %s145
      %s167 = sphi 0, %s169
      %s170 = sphi 0, %s167
      %s171 = sphi 0, %s170
      %s187 = sphi 0, %s171
      %s191 = sphi 0, %s191
      %s193 = sphi 0, %s191
      %s194 = sphi 0, %s193
      %s208 = sphi 0, %s194
      %s212 = sphi 0, %s212
      %s214 = sphi 0, %s212
      %s215 = sphi 0, %s214
      %s229 = sphi 0, %s215
      %s235 = sphi 0, %s237
      %s238 = sphi 0, %s235
      %s239 = sphi 0, %s238
      %s255 = sphi 0, %s239
    $region4: #{tpu_custom_call.1} parent=1 // loop_header_branch
      %22 = sbr.rel (%p20) target = $region8
    $region5: #{tpu_custom_call.1} parent=1 // loop_body
      %s24 = ssub.s32 %s19, 1
      %s25 = ssub.s32 %s19, 2
      %s32 = sadd.s32 1, %s27
      %p33 = scmp.ge.s32.totalorder %s32, 1
      %s34 = scalar_select %p33, 0, %s32
      %s35 = sadd.s32 1, %s26
      %s36 = scalar_select %p33, %s35, %s26
      %p37 = scmp.ge.s32.totalorder %s36, 2
      %s38 = scalar_select %p37, 0, %s36
      %s40 = sadd.s32 %s39, 1
      %p43 = scmp.eq.s32.totalorder %s19, 1
      %p44 = scmp.ne.s32.totalorder %s39, %s41
      %p45 = scmp.eq.s32.totalorder %s19, 0
      %p46 = por %p44, %p45
      %p47 = scmp.ne.s32.totalorder %s39, %s41
      %p48 = scmp.eq.s32.totalorder %s24, 1
      %p49 = por %p47, %p48
      %p50 = scmp.ne.s32.totalorder %s41, %s42
      %p51 = scmp.eq.s32.totalorder %s24, 0
      %p52 = por %p50, %p51
      %p53 = scmp.ne.s32.totalorder %s41, %s42
      %p54 = scmp.eq.s32.totalorder %s25, 1
      %p55 = por %p53, %p54
      %p57 = scmp.ne.s32.totalorder %s42, %s56
      %p58 = scmp.eq.s32.totalorder %s25, 0
      %p59 = por %p57, %p58
      %s61 = sadd.s32 %s60, 1
      %p64 = scmp.eq.s32.totalorder %s19, 1
      %p65 = scmp.ne.s32.totalorder %s60, %s62
      %p66 = scmp.eq.s32.totalorder %s19, 0
      %p67 = por %p65, %p66
      %p68 = scmp.ne.s32.totalorder %s60, %s62
      %p69 = scmp.eq.s32.totalorder %s24, 1
      %p70 = por %p68, %p69
      %p71 = scmp.ne.s32.totalorder %s62, %s63
      %p72 = scmp.eq.s32.totalorder %s24, 0
      %p73 = por %p71, %p72
      %p74 = scmp.ne.s32.totalorder %s62, %s63
      %p75 = scmp.eq.s32.totalorder %s25, 1
      %p76 = por %p74, %p75
      %p78 = scmp.ne.s32.totalorder %s63, %s77
      %p79 = scmp.eq.s32.totalorder %s25, 0
      %p80 = por %p78, %p79
      %s81 = ssub.s32 %s26, %s38
      %s82 = ssub.s32 %s27, %s34
      %s83 = sor.u32 %s81, %s82
      %p84 = scmp.eq.s32.totalorder %s83, 0
      %s86 = sadd.s32 %s85, 1
      %s87 = scalar_select %p84, %s85, %s86
      %p90 = pneg %p84
      %p91 = scmp.eq.s32.totalorder %s19, 1
      %p92 = por %p90, %p91
      %p93 = scmp.ne.s32.totalorder %s85, %s88
      %p94 = scmp.eq.s32.totalorder %s19, 0
      %p95 = por %p93, %p94
      %p96 = scmp.ne.s32.totalorder %s85, %s88
      %p97 = scmp.eq.s32.totalorder %s24, 1
      %p98 = por %p96, %p97
      %p99 = scmp.ne.s32.totalorder %s88, %s89
      %p100 = scmp.eq.s32.totalorder %s24, 0
      %p101 = por %p99, %p100
      %p102 = scmp.ne.s32.totalorder %s88, %s89
      %p103 = scmp.eq.s32.totalorder %s25, 1
      %p104 = por %p102, %p103
      %p106 = scmp.ne.s32.totalorder %s89, %s105
      %p107 = scmp.eq.s32.totalorder %s25, 0
      %p108 = por %p106, %p107
      %s109 = ssub.s32 %s26, %s38
      %s110 = ssub.s32 %s27, %s34
      %s111 = sor.u32 %s109, %s110
      %p112 = scmp.eq.s32.totalorder %s111, 0
      %s114 = sadd.s32 %s113, 1
      %s115 = scalar_select %p112, %s113, %s114
      %p118 = pneg %p112
      %p119 = scmp.eq.s32.totalorder %s19, 1
      %p120 = por %p118, %p119
      %p121 = scmp.ne.s32.totalorder %s113, %s116
      %p122 = scmp.eq.s32.totalorder %s19, 0
      %p123 = por %p121, %p122
      %p124 = scmp.ne.s32.totalorder %s113, %s116
      %p125 = scmp.eq.s32.totalorder %s24, 1
      %p126 = por %p124, %p125
      %p127 = scmp.ne.s32.totalorder %s116, %s117
      %p128 = scmp.eq.s32.totalorder %s24, 0
      %p129 = por %p127, %p128
      %p130 = scmp.ne.s32.totalorder %s116, %s117
      %p131 = scmp.eq.s32.totalorder %s25, 1
      %p132 = por %p130, %p131
      %p134 = scmp.ne.s32.totalorder %s117, %s133
      %p135 = scmp.eq.s32.totalorder %s25, 0
      %p136 = por %p134, %p135
      %s137 = ssub.s32 %s26, %s38
      %s138 = ssub.s32 %s27, %s34
      %s139 = sor.u32 %s137, %s138
      %p140 = scmp.eq.s32.totalorder %s139, 0
      %s142 = sadd.s32 %s141, 1
      %s143 = scalar_select %p140, %s141, %s142
      %p146 = pneg %p140
      %p147 = scmp.eq.s32.totalorder %s19, 1
      %p148 = por %p146, %p147
      %p149 = scmp.ne.s32.totalorder %s141, %s144
      %p150 = scmp.eq.s32.totalorder %s19, 0
      %p151 = por %p149, %p150
      %p152 = scmp.ne.s32.totalorder %s141, %s144
      %p153 = scmp.eq.s32.totalorder %s24, 1
      %p154 = por %p152, %p153
      %p155 = scmp.ne.s32.totalorder %s144, %s145
      %p156 = scmp.eq.s32.totalorder %s24, 0
      %p157 = por %p155, %p156
      %p158 = scmp.ne.s32.totalorder %s144, %s145
      %p159 = scmp.eq.s32.totalorder %s25, 1
      %p160 = por %p158, %p159
      %p162 = scmp.ne.s32.totalorder %s145, %s161
      %p163 = scmp.eq.s32.totalorder %s25, 0
      %p164 = por %p162, %p163
      %s165 = ssub.s32 %s26, %s38
      %p166 = scmp.eq.s32.totalorder %s165, 0
      %s168 = sadd.s32 %s167, 1
      %s169 = scalar_select %p166, %s167, %s168
      %p172 = pneg %p166
      %p173 = scmp.eq.s32.totalorder %s19, 1
      %p174 = por %p172, %p173
      %p175 = scmp.ne.s32.totalorder %s167, %s170
      %p176 = scmp.eq.s32.totalorder %s19, 0
      %p177 = por %p175, %p176
      %p178 = scmp.ne.s32.totalorder %s167, %s170
      %p179 = scmp.eq.s32.totalorder %s24, 1
      %p180 = por %p178, %p179
      %p181 = scmp.ne.s32.totalorder %s170, %s171
      %p182 = scmp.eq.s32.totalorder %s24, 0
      %p183 = por %p181, %p182
      %p184 = scmp.ne.s32.totalorder %s170, %s171
      %p185 = scmp.eq.s32.totalorder %s25, 1
      %p186 = por %p184, %p185
      %p188 = scmp.ne.s32.totalorder %s171, %s187
      %p189 = scmp.eq.s32.totalorder %s25, 0
      %p190 = por %p188, %p189
      %s192 = sadd.s32 %s191, 1
      %p195 = scmp.eq.s32.totalorder %s19, 1
      %p196 = scmp.ne.s32.totalorder %s191, %s193
      %p197 = scmp.eq.s32.totalorder %s19, 0
      %p198 = por %p196, %p197
      %p199 = scmp.ne.s32.totalorder %s191, %s193
      %p200 = scmp.eq.s32.totalorder %s24, 1
      %p201 = por %p199, %p200
      %p202 = scmp.ne.s32.totalorder %s193, %s194
      %p203 = scmp.eq.s32.totalorder %s24, 0
      %p204 = por %p202, %p203
      %p205 = scmp.ne.s32.totalorder %s193, %s194
      %p206 = scmp.eq.s32.totalorder %s25, 1
      %p207 = por %p205, %p206
      %p209 = scmp.ne.s32.totalorder %s194, %s208
      %p210 = scmp.eq.s32.totalorder %s25, 0
      %p211 = por %p209, %p210
      %s213 = sadd.s32 %s212, 1
      %p216 = scmp.eq.s32.totalorder %s19, 1
      %p217 = scmp.ne.s32.totalorder %s212, %s214
      %p218 = scmp.eq.s32.totalorder %s19, 0
      %p219 = por %p217, %p218
      %p220 = scmp.ne.s32.totalorder %s212, %s214
      %p221 = scmp.eq.s32.totalorder %s24, 1
      %p222 = por %p220, %p221
      %p223 = scmp.ne.s32.totalorder %s214, %s215
      %p224 = scmp.eq.s32.totalorder %s24, 0
      %p225 = por %p223, %p224
      %p226 = scmp.ne.s32.totalorder %s214, %s215
      %p227 = scmp.eq.s32.totalorder %s25, 1
      %p228 = por %p226, %p227
      %p230 = scmp.ne.s32.totalorder %s215, %s229
      %p231 = scmp.eq.s32.totalorder %s25, 0
      %p232 = por %p230, %p231
      %s233 = ssub.s32 %s26, %s38
      %p234 = scmp.eq.s32.totalorder %s233, 0
      %s236 = sadd.s32 %s235, 1
      %s237 = scalar_select %p234, %s235, %s236
      %p240 = pneg %p234
      %p241 = scmp.eq.s32.totalorder %s19, 1
      %p242 = por %p240, %p241
      %p243 = scmp.ne.s32.totalorder %s235, %s238
      %p244 = scmp.eq.s32.totalorder %s19, 0
      %p245 = por %p243, %p244
      %p246 = scmp.ne.s32.totalorder %s235, %s238
      %p247 = scmp.eq.s32.totalorder %s24, 1
      %p248 = por %p246, %p247
      %p249 = scmp.ne.s32.totalorder %s238, %s239
      %p250 = scmp.eq.s32.totalorder %s24, 0
      %p251 = por %p249, %p250
      %p252 = scmp.ne.s32.totalorder %s238, %s239
      %p253 = scmp.eq.s32.totalorder %s25, 1
      %p254 = por %p252, %p253
      %p256 = scmp.ne.s32.totalorder %s239, %s255
      %p257 = scmp.eq.s32.totalorder %s25, 0
      %p258 = por %p256, %p257
      %p259 = scmp.le.s32.totalorder 1, %s19
      %p260 = scmp.lt.s32.totalorder %s19, 3
      %p261 = pnand %p259, %p260
      %p262 = pneg %p261
      // Predicated region
      $region9: #{tpu_custom_call.1} parent=5 // pred_check
        _
      $region10: #{tpu_custom_call.1} parent=5 // pred_check_branch
        %264 = sbr.rel (%p261) target = $region12
      $region11: #{tpu_custom_call.1} parent=5 // pred_region
        %s265 = ssub.s32 %s19, 1
        // Predicated region
        $region13: #{tpu_custom_call.1} parent=11 // pred_check
          %p266 = pneg %p52
        $region14: #{tpu_custom_call.1} parent=11 // pred_check_branch
          %268 = sbr.rel (%p266) target = $region16
        $region15: #{tpu_custom_call.1} parent=11 // pred_region
          %s270 = ssub.s32 16, 16
          %271 = vsyncadd [#allocation5], %s270
          %s273 = sshll.u32 %s0, 4
          %s274 = int_to_ptr.vmem [resolvable:$true] %s273
          %276 = dma.vmem_to_smem %s274, 16, [#allocation3], [#allocation5]
        $region16: #{tpu_custom_call.1} parent=11 // pred_fallthru
          _
        // Predicated region
        $region17: #{tpu_custom_call.1} parent=11 // pred_check
          %p277 = pneg %p73
        $region18: #{tpu_custom_call.1} parent=11 // pred_check_branch
          %279 = sbr.rel (%p277) target = $region20
        $region19: #{tpu_custom_call.1} parent=11 // pred_region
          %s281 = ssub.s32 16, 16
          %282 = vsyncadd [#allocation7], %s281
          %s284 = sshll.u32 %s1, 4
          %s285 = int_to_ptr.vmem [resolvable:$true] %s284
          %287 = dma.vmem_to_smem %s285, 16, [#allocation6], [#allocation7]
        $region20: #{tpu_custom_call.1} parent=11 // pred_fallthru
          _
        // Predicated region
        $region21: #{tpu_custom_call.1} parent=11 // pred_check
          %p288 = pneg %p204
        $region22: #{tpu_custom_call.1} parent=11 // pred_check_branch
          %290 = sbr.rel (%p288) target = $region24
        $region23: #{tpu_custom_call.1} parent=11 // pred_region
          _
        $region24: #{tpu_custom_call.1} parent=11 // pred_fallthru
          _
        // Predicated region
        $region25: #{tpu_custom_call.1} parent=11 // pred_check
          %p291 = pneg %p225
        $region26: #{tpu_custom_call.1} parent=11 // pred_check_branch
          %293 = sbr.rel (%p291) target = $region28
        $region27: #{tpu_custom_call.1} parent=11 // pred_region
          _
        $region28: #{tpu_custom_call.1} parent=11 // pred_fallthru
          _
      $region12: #{tpu_custom_call.1} parent=5 // pred_fallthru
        _
      %p294 = scmp.lt.s32.totalorder %s19, 2
      // Predicated region
      $region29: #{tpu_custom_call.1} parent=5 // pred_check
        %p295 = pneg %p294
      $region30: #{tpu_custom_call.1} parent=5 // pred_check_branch
        %297 = sbr.rel (%p295) target = $region32
      $region31: #{tpu_custom_call.1} parent=5 // pred_region
        // Predicated region
        $region33: #{tpu_custom_call.1} parent=31 // pred_check
          %p298 = pneg %p95
        $region34: #{tpu_custom_call.1} parent=31 // pred_check_branch
          %300 = sbr.rel (%p298) target = $region36
        $region35: #{tpu_custom_call.1} parent=31 // pred_region
          %s301 = smul.u32 2, %s27
          %p302 = scmp.lt.s32.totalorder %s26, 1
          %s303 = scalar_select %p302, %s26, 1
          %p304 = scmp.lt.s32.totalorder %s301, 1
          %s305 = scalar_select %p304, %s301, 1
          %s306 = smul.addr %s303, 2
          %s307 = sadd.s32 %s305, %s306
          %s308 = smul.addr %s307, 4
          %s309 = scalar_lea.vmem %s2, %s308
          %s310 = smul.u32 2, %s27
        $region36: #{tpu_custom_call.1} parent=31 // pred_fallthru
          _
        // Predicated region
        $region37: #{tpu_custom_call.1} parent=31 // pred_check
          %p311 = pneg %p123
        $region38: #{tpu_custom_call.1} parent=31 // pred_check_branch
          %313 = sbr.rel (%p311) target = $region40
        $region39: #{tpu_custom_call.1} parent=31 // pred_region
          %s314 = smul.u32 2, %s27
          %p315 = scmp.lt.s32.totalorder %s26, 1
          %s316 = scalar_select %p315, %s26, 1
          %p317 = scmp.lt.s32.totalorder %s314, 1
          %s318 = scalar_select %p317, %s314, 1
          %s319 = smul.addr %s316, 2
          %s320 = sadd.s32 %s318, %s319
          %s321 = smul.addr %s320, 4
          %s322 = scalar_lea.vmem %s3, %s321
          %s323 = smul.u32 2, %s27
        $region40: #{tpu_custom_call.1} parent=31 // pred_fallthru
          _
        // Predicated region
        $region41: #{tpu_custom_call.1} parent=31 // pred_check
          %p324 = pneg %p151
        $region42: #{tpu_custom_call.1} parent=31 // pred_check_branch
          %326 = sbr.rel (%p324) target = $region44
        $region43: #{tpu_custom_call.1} parent=31 // pred_region
          %s327 = smul.u32 2, %s27
          %p328 = scmp.lt.s32.totalorder %s26, 1
          %s329 = scalar_select %p328, %s26, 1
          %p330 = scmp.lt.s32.totalorder %s327, 1
          %s331 = scalar_select %p330, %s327, 1
          %s332 = smul.addr %s329, 2
          %s333 = sadd.s32 %s331, %s332
          %s334 = smul.addr %s333, 4
          %s335 = scalar_lea.vmem %s4, %s334
          %s336 = smul.u32 2, %s27
        $region44: #{tpu_custom_call.1} parent=31 // pred_fallthru
          _
        // Predicated region
        $region45: #{tpu_custom_call.1} parent=31 // pred_check
          %p337 = pneg %p177
        $region46: #{tpu_custom_call.1} parent=31 // pred_check_branch
          %339 = sbr.rel (%p337) target = $region48
        $region47: #{tpu_custom_call.1} parent=31 // pred_region
          %p340 = scmp.lt.s32.totalorder %s26, 1
          %s341 = scalar_select %p340, %s26, 1
          %s342 = smul.addr %s341, 4
          %s343 = smul.addr %s342, 8
          %s344 = scalar_lea.vmem %s5, %s343
        $region48: #{tpu_custom_call.1} parent=31 // pred_fallthru
          _
      $region32: #{tpu_custom_call.1} parent=5 // pred_fallthru
        _
      %p345 = scmp.le.s32.totalorder 1, %s19
      %p346 = scmp.lt.s32.totalorder %s19, 3
      %p347 = pnand %p345, %p346
      %p348 = pneg %p347
      // Predicated region
      $region49: #{tpu_custom_call.1} parent=5 // pred_check
        _
      $region50: #{tpu_custom_call.1} parent=5 // pred_check_branch
        %350 = sbr.rel (%p347) target = $region52
      $region51: #{tpu_custom_call.1} parent=5 // pred_region
        %s351 = ssub.s32 %s19, 1
        // Predicated region
        $region53: #{tpu_custom_call.1} parent=51 // pred_check
          %p352 = pneg %p52
        $region54: #{tpu_custom_call.1} parent=51 // pred_check_branch
          %354 = sbr.rel (%p352) target = $region56
        $region55: #{tpu_custom_call.1} parent=51 // pred_region
          %355 = dma.done [#allocation5], 16
        $region56: #{tpu_custom_call.1} parent=51 // pred_fallthru
          _
        // Predicated region
        $region57: #{tpu_custom_call.1} parent=51 // pred_check
          %p356 = pneg %p73
        $region58: #{tpu_custom_call.1} parent=51 // pred_check_branch
          %358 = sbr.rel (%p356) target = $region60
        $region59: #{tpu_custom_call.1} parent=51 // pred_region
          %359 = dma.done [#allocation7], 16
        $region60: #{tpu_custom_call.1} parent=51 // pred_fallthru
          _
        %360 = sfence
        %p361 = pneg %p52
        %p362 = pneg %p49
        %p363 = pneg %p73
        %p364 = pneg %p70
        %s365 = smul.u32 2, %s29
        %p366 = scmp.lt.s32.totalorder %s28, 1
        %s367 = scalar_select %p366, %s28, 1
        %p368 = scmp.lt.s32.totalorder %s365, 1
        %s369 = scalar_select %p368, %s365, 1
        %s370 = smul.addr %s367, 2
        %s371 = sadd.s32 %s369, %s370
        %s372 = smul.addr %s371, 4
        %s373 = scalar_lea.vmem %s2, %s372
        %p374 = pneg %p101
        %p375 = pneg %p98
        %s376 = smul.u32 2, %s29
        %p377 = scmp.lt.s32.totalorder %s28, 1
        %s378 = scalar_select %p377, %s28, 1
        %p379 = scmp.lt.s32.totalorder %s376, 1
        %s380 = scalar_select %p379, %s376, 1
        %s381 = smul.addr %s378, 2
        %s382 = sadd.s32 %s380, %s381
        %s383 = smul.addr %s382, 4
        %s384 = scalar_lea.vmem %s3, %s383
        %p385 = pneg %p129
        %p386 = pneg %p126
        %s387 = smul.u32 2, %s29
        %p388 = scmp.lt.s32.totalorder %s28, 1
        %s389 = scalar_select %p388, %s28, 1
        %p390 = scmp.lt.s32.totalorder %s387, 1
        %s391 = scalar_select %p390, %s387, 1
        %s392 = smul.addr %s389, 2
        %s393 = sadd.s32 %s391, %s392
        %s394 = smul.addr %s393, 4
        %s395 = scalar_lea.vmem %s4, %s394
        %p396 = pneg %p157
        %p397 = pneg %p154
        %p398 = scmp.lt.s32.totalorder %s28, 1
        %s399 = scalar_select %p398, %s28, 1
        %s400 = smul.addr %s399, 4
        %s401 = smul.addr %s400, 8
        %s402 = scalar_lea.vmem %s5, %s401
        %p403 = pneg %p183
        %p404 = pneg %p180
        %p405 = pneg %p204
        %p406 = pneg %p201
        %p407 = pneg %p225
        %p408 = pneg %p222
        %p409 = pneg %p251
        %p410 = pneg %p248
        %s411 = sand.u32 %s238, 1
        %s412 = scalar_lea.sflag [#allocation4], %s411
        %s413 = sand.u32 %s238, 1
        %s414 = smul.addr %s413, 8
        %s415 = scalar_lea.vmem [#allocation8], %s414
        %s416 = smul.u32 2, %s29
        %p417 = scmp.lt.s32.totalorder %s28, 1
        %s418 = scalar_select %p417, %s28, 1
        %p419 = scmp.lt.s32.totalorder %s416, 1
        %s420 = scalar_select %p419, %s416, 1
        %s421 = smul.addr %s418, 2
        %s422 = sadd.s32 %s420, %s421
        %s423 = smul.addr %s422, 4
        %s424 = scalar_lea.vmem %s2, %s423
        %s425 = smul.u32 2, %s29
        %s426 = smul.u32 2, %s29
        %p427 = scmp.lt.s32.totalorder %s28, 1
        %s428 = scalar_select %p427, %s28, 1
        %p429 = scmp.lt.s32.totalorder %s426, 1
        %s430 = scalar_select %p429, %s426, 1
        %s431 = smul.addr %s428, 2
        %s432 = sadd.s32 %s430, %s431
        %s433 = smul.addr %s432, 4
        %s434 = scalar_lea.vmem %s3, %s433
        %s435 = smul.u32 2, %s29
        %s436 = smul.u32 2, %s29
        %p437 = scmp.lt.s32.totalorder %s28, 1
        %s438 = scalar_select %p437, %s28, 1
        %p439 = scmp.lt.s32.totalorder %s436, 1
        %s440 = scalar_select %p439, %s436, 1
        %s441 = smul.addr %s438, 2
        %s442 = sadd.s32 %s440, %s441
        %s443 = smul.addr %s442, 4
        %s444 = scalar_lea.vmem %s4, %s443
        %s445 = smul.u32 2, %s29
        %p446 = scmp.lt.s32.totalorder %s28, 1
        %s447 = scalar_select %p446, %s28, 1
        %s448 = smul.addr %s447, 4
        %s449 = smul.addr %s448, 8
        %s450 = scalar_lea.vmem %s5, %s449
        %p452 = scmp.eq.s32.totalorder %s29, 0
        // Predicated region
        $region61: #{tpu_custom_call.1} parent=51 // pred_check
          %p453 = pneg %p452
        $region62: #{tpu_custom_call.1} parent=51 // pred_check_branch
          %455 = sbr.rel (%p453) target = $region64
        $region63: #{tpu_custom_call.1} parent=51 // pred_region
          %v456 = vlaneseq
          %vm457 = vcmp.ge.s32.totalorder %v456, 0
          %vm458 = vcmp.lt.s32.totalorder %v456, 256
          %vm459 = vmand %vm457, %vm458
          %460 = vst.msk [vmem:[#allocation2] sm:$0x3] %vm459, 0.0
        $region64: #{tpu_custom_call.1} parent=51 // pred_fallthru
          _
        %s461 = sld [smem:[#allocation3 + %s28]]
        %s462 = sld [smem:[#allocation6 + %s28]]
        %v463 = vld [vmem:[%s424] sm:$0xff]
        %v464 = vld [vmem:[%s434] sm:$0xff]
        %v465 = vld [vmem:[%s444] sm:$0xff]
        %v466 = vstv %s461
        %v467 = vmul.f32 %v466, %v463
        %v468 = vstv %s462
        %v469 = vmul.f32 %v468, %v464
        %v470 = vadd.f32 %v467, %v469
        %v472 = vcombine.high %v470, %v470
        %v475 = vcombine.low %v465, %v465
        %vm477 = vcmask 1043456
        %v478 = vsel %vm477, %v470, %v475
        %v479 = vsel %vm477, %v472, %v465
        %v480 = vpack.c.bf16 %v478, %v478
        %v481 = vpack.c.bf16 %v479, %v479
        %v482 = vld [vmem:[%s6] sm:$0xf]
        %v483 = vld [vmem:[%s6 + $0x4] sm:$0xf]
        %v484 = vld [vmem:[%s6 + $0x8] sm:$0xf]
        %v485 = vld [vmem:[%s6 + $0xc] sm:$0xf]
        %v486 = vld [vmem:[%s450] sm:$0xff]
        %v487 = vld [vmem:[%s450 + $0x8] sm:$0xff]
        %v488 = vld [vmem:[%s450 + $0x10] sm:$0xff]
        %v489 = vld [vmem:[%s450 + $0x18] sm:$0xff]
        %491 = vset.pattern.permute.xlu0 0
        %492 = vperm.xlu0 %491, %v486
        %v493 = vpop.permute.xlu0 %492
        %496 = vset.pattern.permute.xlu0 0
        %497 = vperm.xlu0 %496, %v487
        %v498 = vpop.permute.xlu0 %497
        %501 = vset.pattern.permute.xlu0 0
        %502 = vperm.xlu0 %501, %v488
        %v503 = vpop.permute.xlu0 %502
        %506 = vset.pattern.permute.xlu0 0
        %507 = vperm.xlu0 %506, %v489
        %v508 = vpop.permute.xlu0 %507
        %v514 = vunpack.c.l.b16 %v482
        %v515 = vunpack.c.l.b16 %v483
        %v516 = vunpack.c.l.b16 %v484
        %v517 = vunpack.c.l.b16 %v485
        %v518 = vpack.c.b16 %v515, %v514
        %v519 = vpack.c.b16 %v517, %v516
        %vm520 = vcmask 64512
        %v522 = vsel %vm520, %v518, 0
        %v525 = vsel %vm520, %v519, 0
        %v528 = vsel %vm477, %v480, 0
        %v531 = vsel %vm477, %v481, 0
        %533 = vmatprep.subr.bf16.mxu0 0
        %534 = vmatpush1.bf16.msra.mxu0 0
        %535 = vmatprep.subr.bf16.mxu0 0
        %536 = vmatpush1.bf16.msra.mxu0 0
        %537 = vmatprep.subr.bf16.mxu0 0
        %538 = vmatpush1.bf16.msra.mxu0 0
        %539 = vmatprep.subr.bf16.mxu0 0
        %540 = vmatpush1.bf16.msra.mxu0 0
        %541 = vmatprep.subr.bf16.mxu0 0
        %542 = vmatpush1.bf16.msra.mxu0 0
        %543 = vmatprep.subr.bf16.mxu0 0
        %544 = vmatpush1.bf16.msra.mxu0 0
        %545 = vmatprep.subr.bf16.mxu0 0
        %546 = vmatpush1.bf16.msra.mxu0 0
        %547 = vmatprep.subr.bf16.mxu0 %v531
        %548 = vmatpush1.bf16.msra.mxu0 %v528
        %549 = vmatprep.subr.bf16.mxu0 0
        %550 = vmatpush2.bf16.msra.mxu0 0
        %551 = vmatprep.subr.bf16.mxu0 0
        %552 = vmatpush2.bf16.msra.mxu0 0
        %553 = vmatprep.subr.bf16.mxu0 0
        %554 = vmatpush2.bf16.msra.mxu0 0
        %555 = vmatprep.subr.bf16.mxu0 0
        %556 = vmatpush2.bf16.msra.mxu0 0
        %557 = vmatprep.subr.bf16.mxu0 0
        %558 = vmatpush2.bf16.msra.mxu0 0
        %559 = vmatprep.subr.bf16.mxu0 0
        %560 = vmatpush2.bf16.msra.mxu0 0
        %561 = vmatprep.subr.bf16.mxu0 0
        %562 = vmatpush2.bf16.msra.mxu0 0
        %563 = vmatprep.subr.bf16.mxu0 0
        %564 = vmatpush2.bf16.msra.mxu0 0
        %565 = vmatprep.mubr.bf16.mxu0 0
        %566 = vmatmul.mubr.bf16.gmra.mxu0 %v522
        %v567 = vpop.f32.mrf.mxu0
        %v568 = vadd.f32 %v493, %v567
        %v569 = vpop.f32.mrf.mxu0
        %v570 = vadd.f32 %v493, %v569
        %v571 = vpop.f32.mrf.mxu0
        %v572 = vadd.f32 %v498, %v571
        %v573 = vpop.f32.mrf.mxu0
        %v574 = vadd.f32 %v498, %v573
        %575 = vmatprep.mubr.bf16.mxu0 0
        %576 = vmatmul.mubr.bf16.gmra.mxu0 %v525
        %v577 = vpop.f32.mrf.mxu0
        %v578 = vadd.f32 %v503, %v577
        %v579 = vpop.f32.mrf.mxu0
        %v580 = vadd.f32 %v503, %v579
        %v581 = vpop.f32.mrf.mxu0
        %v582 = vadd.f32 %v508, %v581
        %v583 = vpop.f32.mrf.mxu0
        %v584 = vadd.f32 %v508, %v583
        %585 = vdwg.mxu0
        %v586 = vmax.f32 %v568, 0.0
        %v587 = vmax.f32 %v570, 0.0
        %v588 = vmax.f32 %v572, 0.0
        %v589 = vmax.f32 %v574, 0.0
        %v590 = vmax.f32 %v578, 0.0
        %v591 = vmax.f32 %v580, 0.0
        %v592 = vmax.f32 %v582, 0.0
        %v593 = vmax.f32 %v584, 0.0
        %v594 = vld [vmem:[%s7] sm:$0x3]
        %v595 = vpack.c.bf16 %v588, %v586
        %v596 = vpack.c.bf16 %v589, %v587
        %v597 = vpack.c.bf16 %v592, %v590
        %v598 = vpack.c.bf16 %v593, %v591
        %vm599 = vcmask 261120
        %v601 = vsel %vm599, %v594, 0
        %603 = vmatprep.subr.bf16.mxu0 0
        %604 = vmatpush1.bf16.msra.mxu0 0
        %605 = vmatprep.subr.bf16.mxu0 0
        %606 = vmatpush1.bf16.msra.mxu0 0
        %607 = vmatprep.subr.bf16.mxu0 0
        %608 = vmatpush1.bf16.msra.mxu0 0
        %609 = vmatprep.subr.bf16.mxu0 0
        %610 = vmatpush1.bf16.msra.mxu0 0
        %611 = vmatprep.subr.bf16.mxu0 0
        %612 = vmatpush1.bf16.msra.mxu0 0
        %613 = vmatprep.subr.bf16.mxu0 0
        %614 = vmatpush1.bf16.msra.mxu0 0
        %615 = vmatprep.subr.bf16.mxu0 %v598
        %616 = vmatpush1.bf16.msra.mxu0 %v597
        %617 = vmatprep.subr.bf16.mxu0 %v596
        %618 = vmatpush1.bf16.msra.mxu0 %v595
        %619 = vmatprep.subr.bf16.mxu0 0
        %620 = vmatpush2.bf16.msra.mxu0 0
        %621 = vmatprep.subr.bf16.mxu0 0
        %622 = vmatpush2.bf16.msra.mxu0 0
        %623 = vmatprep.subr.bf16.mxu0 0
        %624 = vmatpush2.bf16.msra.mxu0 0
        %625 = vmatprep.subr.bf16.mxu0 0
        %626 = vmatpush2.bf16.msra.mxu0 0
        %627 = vmatprep.subr.bf16.mxu0 0
        %628 = vmatpush2.bf16.msra.mxu0 0
        %629 = vmatprep.subr.bf16.mxu0 0
        %630 = vmatpush2.bf16.msra.mxu0 0
        %631 = vmatprep.subr.bf16.mxu0 0
        %632 = vmatpush2.bf16.msra.mxu0 0
        %633 = vmatprep.subr.bf16.mxu0 0
        %634 = vmatpush2.bf16.msra.mxu0 0
        %635 = vmatprep.mubr.bf16.mxu0 0
        %636 = vmatmul.mubr.bf16.gmra.mxu0 %v601
        %v637 = vpop.f32.mrf.mxu0
        %v638 = vadd.f32 0.0, %v637
        %v639 = vpop.f32.mrf.mxu0
        %v640 = vadd.f32 0.0, %v639
        %v641 = vpop.f32.mrf.mxu0
        %v642 = vpop.f32.mrf.mxu0
        %643 = vdwg.mxu0
        %v645 = vcombine.high %v464, %v464
        %v647 = vsub.f32 %v638, %v464
        %v648 = vsub.f32 %v640, %v645
        %v649 = vld [vmem:[#allocation2] sm:$0x3]
        %v650 = vmul.f32 %v647, %v647
        %v651 = vmul.f32 %v648, %v648
        %v652 = vsel %vm477, %v650, 0.0
        %v653 = vrot.slane %v652, 4
        %v654 = vadd.f32 %v652, %v653
        %v655 = vrot.slane %v654, 2
        %v656 = vadd.f32 %v654, %v655
        %v657 = vrot.slane %v656, 1
        %v658 = vadd.f32 %v656, %v657
        %v659 = vsel %vm477, %v651, 0.0
        %v660 = vrot.slane %v659, 4
        %v661 = vadd.f32 %v659, %v660
        %v662 = vrot.slane %v661, 2
        %v663 = vadd.f32 %v661, %v662
        %v664 = vrot.slane %v663, 1
        %v665 = vadd.f32 %v663, %v664
        %v668 = vcombine.low %v658, %v665
        %v670 = vunpack.c.l.s4 1966171168
        %v671 = vunpack.c.0.s8 %v670
        %v672 = vlaneseq
        %v673 = vshrl.u32 %v672, 7
        %v674 = vsub.s32 %v671, %v673
        %v675 = vrot.slane %v668, %v674
        %v677 = vunpack.c.l.s4 1966171168
        %v678 = vunpack.c.0.s8 %v677
        %v679 = vlaneseq
        %v680 = vshrl.u32 %v679, 7
        %v681 = vsub.s32 %v678, %v680
        %v682 = vrot.slane %v675, %v681
        %v684 = vadd.f32 %v649, %v682
        %v685 = vlaneseq
        %vm686 = vcmp.ge.s32.totalorder %v685, 0
        %vm687 = vcmp.lt.s32.totalorder %v685, 256
        %vm688 = vmand %vm686, %vm687
        %689 = vst.msk [vmem:[#allocation2] sm:$0x3] %vm688, %v684
        // Predicated region
        $region65: #{tpu_custom_call.1} parent=51 // pred_check
          %p690 = pneg %p452
        $region66: #{tpu_custom_call.1} parent=51 // pred_check_branch
          %692 = sbr.rel (%p690) target = $region68
        $region67: #{tpu_custom_call.1} parent=51 // pred_region
          %v693 = vld [vmem:[#allocation2] sm:$0x3]
          %v695 = vlaneseq
          %v696 = vshrl.u32 %v695, 7
          %v697 = vsub.s32 0, %v696
          %v698 = vrot.slane %v693, %v697
          %v699 = vlaneseq
          %v700 = vshrl.u32 %v699, 7
          %v701 = vsub.s32 1, %v700
          %v702 = vrot.slane %v693, %v701
          %vm705 = vcmask 1040384
          %v706 = vsel %vm705, %v698, 0.0
          %v707 = vsel %vm705, %v702, 0.0
          %v708 = vadd.f32 %v706, %v707
          %709 = vadd.xlane.f32.xlu0 %v708
          %v710 = vpop.xlane.xlu0 %709
          %v711 = vrot.slane %v710, 4
          %v712 = vadd.f32 %v710, %v711
          %v713 = vrot.slane %v712, 2
          %v714 = vadd.f32 %v712, %v713
          %v715 = vrot.slane %v714, 1
          %v716 = vadd.f32 %v714, %v715
          %s717 = vtos %v716
          %v718 = vstv %s717
          %719 = vst [vmem:[%s415] sm:$0xff] %v718
        $region68: #{tpu_custom_call.1} parent=51 // pred_fallthru
          _
        %s720 = sand.u32 %s238, 1
        %s721 = scalar_lea.sflag [#allocation4], %s720
        %s722 = sand.u32 %s238, 1
        %s723 = smul.addr %s722, 8
        %s724 = scalar_lea.vmem [#allocation8], %s723
        // Predicated region
        $region69: #{tpu_custom_call.1} parent=51 // pred_check
          %p725 = pneg %p248
        $region70: #{tpu_custom_call.1} parent=51 // pred_check_branch
          %727 = sbr.rel (%p725) target = $region72
        $region71: #{tpu_custom_call.1} parent=51 // pred_region
          %s729 = ssub.s32 128, 128
          %730 = vsyncadd %s721, %s729
          %s731 = smul.addr %s28, 128
          %s732 = scalar_lea.hbm %s8, %s731
          %s734 = sshll.u32 %s724, 4
          %s735 = int_to_ptr.vmem [resolvable:$true] %s734
          %737 = dma.vmem_to_hbm [thread:$0]  %s735, 128, %s732, %s721
        $region72: #{tpu_custom_call.1} parent=51 // pred_fallthru
          _
      $region52: #{tpu_custom_call.1} parent=5 // pred_fallthru
        _
      %p738 = scmp.le.s32.totalorder 2, %s19
      // Predicated region
      $region73: #{tpu_custom_call.1} parent=5 // pred_check
        %p739 = pneg %p738
      $region74: #{tpu_custom_call.1} parent=5 // pred_check_branch
        %741 = sbr.rel (%p739) target = $region76
      $region75: #{tpu_custom_call.1} parent=5 // pred_region
        %s742 = ssub.s32 %s19, 2
        // Predicated region
        $region77: #{tpu_custom_call.1} parent=75 // pred_check
          %p743 = pneg %p254
        $region78: #{tpu_custom_call.1} parent=75 // pred_check_branch
          %745 = sbr.rel (%p743) target = $region80
        $region79: #{tpu_custom_call.1} parent=75 // pred_region
          %s746 = sand.u32 %s239, 1
          %s747 = scalar_lea.sflag [#allocation4], %s746
          %s748 = sand.u32 %s239, 1
          %s749 = smul.addr %s748, 8
          %s750 = scalar_lea.vmem [#allocation8], %s749
          %751 = dma.done %s747, 128
        $region80: #{tpu_custom_call.1} parent=75 // pred_fallthru
          _
      $region76: #{tpu_custom_call.1} parent=5 // pred_fallthru
        _
    $region6: #{tpu_custom_call.1} parent=1 // loop_footer
      %s23 = sadd.s32 1, %s19
    $region7: #{tpu_custom_call.1} parent=1 // loop_footer_branch
      %18 = sbr.rel target = $region3
    $region8: #{tpu_custom_call.1} parent=1 // loop_exit
      _
    %752 = vsyncpa [#allocation4], 1
    %s753 = scalar_lea.sflag [#allocation4], 1
    %754 = vsyncpa %s753, 1
    %755 = vsyncpa [#allocation5], 1
    %s756 = scalar_lea.sflag [#allocation5], 1
    %757 = vsyncpa %s756, 1
    %758 = vsyncpa [#allocation7], 1

</llo_original>
